<compile_context>
chip_gen: v7x
topology: tpu7x:2x2x1
jax: 0.10.0
libtpu: 0.0.40
codegen_flags: <defaults>
</compile_context>

<pallas_src>
import jax
import jax.numpy as jnp
from jax.experimental import pallas as pl
from jax.experimental.pallas import tpu as pltpu

EPS = 1e-5  # RMSNorm epsilon (matches the reference RMSNorm)


def rmsnorm_head_kernel_cached(x_ref, g_ref, w_ref, o_ref, xn_ref):
    # Prefill path (ceil(M/tm) > 1).
    # x_ref:  [tm, D]  activations tile (embedding rows)
    # g_ref:  [1, D]   RMSNorm scale
    # w_ref:  [D, tv]  output-head weight tile (pre-transposed [D, V] layout)
    # o_ref:  [tm, tv] logits tile
    # xn_ref: [tm, D]  VMEM scratch: normalized activations (matmul dtype)
    #
    # CORRECTNESS GUARD: xn_ref is cached across the vocab grid axis.  This is
    # only valid because the vocab axis is the INNERMOST grid axis and is
    # marked "arbitrary" (so j == 0 runs first for every i on every core).
    # Do not reorder the grid or mark the vocab axis "parallel" on this path.
    @pl.when(pl.program_id(1) == 0)
    def _():
        xf = x_ref[...].astype(jnp.float32)
        ms = jnp.mean(xf * xf, axis=-1, keepdims=True)           # mean of squares
        xn = xf * jax.lax.rsqrt(ms + EPS)                         # normalize (f32)
        xn = xn * g_ref[...].astype(jnp.float32)                  # learned scale
        xn_ref[...] = xn.astype(xn_ref.dtype)                     # matmul dtype

    o_ref[...] = jnp.dot(
        xn_ref[...], w_ref[...], preferred_element_type=jnp.float32
    ).astype(o_ref.dtype)


def rmsnorm_head_kernel_recompute(x_ref, g_ref, w_ref, o_ref):
    # Decode / short-sequence path (ceil(M/tm) == 1): recompute RMSNorm per
    # vocab tile so both grid axes can be "parallel" (v7x megacore over vocab).
    xf = x_ref[...].astype(jnp.float32)
    ms = jnp.mean(xf * xf, axis=-1, keepdims=True)
    xn = xf * jax.lax.rsqrt(ms + EPS) * g_ref[...].astype(jnp.float32)
    o_ref[...] = jnp.dot(
        xn.astype(w_ref.dtype), w_ref[...], preferred_element_type=jnp.float32
    ).astype(o_ref.dtype)


def llama2_forward(tokens, emb_table, norm_weight, out_head_weight,
                   *, tm=None, tv=None, vmem_budget_bytes=None):
    """tokens: [B, T] int32; emb_table: [V, D]; norm_weight: [D];
    out_head_weight: [V, D] (PyTorch nn.Linear layout).  Returns [B, T, V]."""
    B, T = tokens.shape
    V, D = emb_table.shape
    assert out_head_weight.shape == (V, D)
    M = B * T

    # Glue: embedding gather (nn.Embedding) in plain JAX.
    # TODO(synk): fuse the gather via PrefetchScalarGridSpec(num_scalar_prefetch=1)
    # + manual DMA from emb_table (pl.ANY) to drop the [M, D] HBM intermediate.
    x = jnp.take(emb_table, tokens.reshape(-1), axis=0)           # [M, D]
    g = norm_weight.reshape(1, D)

    # One-time HBM transpose of the head to [D, V]; the in-kernel contraction
    # is then a plain [tm, D] @ [D, tv] dot.  Constant-folded under jit for a
    # fixed checkpoint, far cheaper than any per-tile on-chip transpose.
    w_t = out_head_weight.T                                        # [D, V]

    compute_dtype = out_head_weight.dtype   # bf16 for real Llama2 checkpoints
    out_dtype = out_head_weight.dtype

    # ---- generation-aware VMEM budget and tile caps ----
    try:
        info = pltpu.get_tpu_info()
        vmem_capacity = int(getattr(info, "vmem_capacity_bytes",
                                    64 * 1024 * 1024))
    except Exception:                                              # be robust
        vmem_capacity = 64 * 1024 * 1024

    if vmem_budget_bytes is None:
        if vmem_capacity >= 128 * 1024 * 1024:        # v5e / v6e (128 MiB)
            vmem_budget_bytes = 96 * 1024 * 1024
            tm_cap, tv_cap = 2048, 512
        else:                                         # v7x (64 MiB per TC)
            vmem_budget_bytes = 48 * 1024 * 1024
            tm_cap, tv_cap = 1024, 512
    else:
        tm_cap, tv_cap = 1024, 512

    if tm is None:
        tm = M if M <= tm_cap else tm_cap              # full dim, or 8-aligned
    if tv is None:
        tv = V if V <= tv_cap else tv_cap              # full dim, or 128-aligned

    def est_bytes(tm_, tv_, cached_):
        db = 2  # double-buffering of pipelined operands
        b_x = tm_ * D * jnp.dtype(x.dtype).itemsize * db
        b_w = D * tv_ * jnp.dtype(w_t.dtype).itemsize * db
        b_o = tm_ * tv_ * jnp.dtype(out_dtype).itemsize * db
        b_s = tm_ * D * jnp.dtype(compute_dtype).itemsize if cached_ else 0
        b_g = D * jnp.dtype(g.dtype).itemsize * db
        return b_x + b_w + b_o + b_s + b_g
        # TODO(synk): x only refetches once per M tile — pipeline_mode=
        # pl.Buffered(1) on its BlockSpec would reclaim ~tm*D bytes on v7x;
        # pl.Buffered(3) on the weight stream can smooth per-step bubbles.

    def fits(tm_, tv_):
        return est_bytes(tm_, tv_, pl.cdiv(M, tm_) > 1) <= vmem_budget_bytes

    # Shrink the vocab tile (then the M tile) if the budget is exceeded,
    # keeping 128- / 8-alignment so block shapes stay legal.
    while not fits(tm, tv) and tv > 128:
        tv = max(128, ((tv // 2) // 128) * 128)
    while not fits(tm, tv) and tm > 8:
        tm = max(8, ((tm // 2) // 8) * 8)

    grid = (pl.cdiv(M, tm), pl.cdiv(V, tv))            # vocab axis innermost
    cached = grid[0] > 1

    vmem_limit = int(min(
        vmem_capacity,
        max(32 * 1024 * 1024,
            est_bytes(tm, tv, cached) * 7 // 5 + 4 * 1024 * 1024)))

    in_specs = [
        pl.BlockSpec((tm, D), lambda i, j: (i, 0)),    # activations
        pl.BlockSpec((1, D), lambda i, j: (0, 0)),     # rms scale
        pl.BlockSpec((D, tv), lambda i, j: (0, j)),    # head weight [D, V]
    ]
    out_spec = pl.BlockSpec((tm, tv), lambda i, j: (i, j))

    if cached:
        kernel = rmsnorm_head_kernel_cached
        scratch = [pltpu.VMEM((tm, D), compute_dtype)]
        # xn scratch cached across vocab axis -> vocab axis MUST be arbitrary.
        dims = ("parallel", "arbitrary")
    else:
        kernel = rmsnorm_head_kernel_recompute
        scratch = []
        # No cross-iteration state: both axes parallel so v7x cores split the
        # vocab tiles for decode-shaped inputs.
        dims = ("parallel", "parallel")

    logits = pl.pallas_call(
        kernel,
        out_shape=jax.ShapeDtypeStruct((M, V), out_dtype),
        grid_spec=pltpu.PrefetchScalarGridSpec(
            num_scalar_prefetch=0,
            grid=grid,
            in_specs=in_specs,
            out_specs=out_spec,
            scratch_shapes=scratch,
        ),
        compiler_params=pltpu.CompilerParams(
            dimension_semantics=dims,
            vmem_limit_bytes=vmem_limit,
        ),
    )(x, g, w_t)

    return logits.reshape(B, T, V)


def reference_forward(tokens, emb_table, norm_weight, out_head_weight):
    x = jnp.take(emb_table, tokens.reshape(-1), axis=0).astype(jnp.float32)
    ms = jnp.mean(x * x, axis=-1, keepdims=True)
    xn = x * jax.lax.rsqrt(ms + EPS) * norm_weight[None, :].astype(jnp.float32)
    logits = xn @ out_head_weight.T.astype(jnp.float32)
    B, T = tokens.shape
    return logits.reshape(B, T, -1)


if __name__ == "__main__":
    # Small synthetic config (Llama2-like but tiny):
    cfg = dict(vocab_size=256, emb_dim=128, context_length=8,
               n_heads=4, n_layers=2, dtype=jnp.float32)

    key = jax.random.PRNGKey(0)
    k_tok, k_emb, k_head = jax.random.split(key, 3)

    B, T = 2, cfg["context_length"]
    tokens = jax.random.randint(k_tok, (B, T), 0, cfg["vocab_size"],
                                dtype=jnp.int32)

    emb_table = (jax.random.normal(k_emb, (cfg["vocab_size"], cfg["emb_dim"]),
                                   dtype=jnp.float32) * 0.02)
    norm_weight = jnp.ones((cfg["emb_dim"],), dtype=jnp.float32)  # RMSNorm init
    out_head_weight = (jax.random.normal(
        k_head, (cfg["vocab_size"], cfg["emb_dim"]), dtype=jnp.float32) * 0.02)

    logits = llama2_forward(tokens, emb_table, norm_weight, out_head_weight)
    logits = jax.block_until_ready(logits)

    ref = reference_forward(tokens, emb_table, norm_weight, out_head_weight)
    assert logits.shape == (B, T, cfg["vocab_size"])
    assert jnp.allclose(logits.astype(jnp.float32), ref, atol=1e-4, rtol=1e-4)

    print("KERNEL_OK")
</pallas_src>

<mosaic_0001>
module attributes {stable_mosaic.version = 11 : i64} {
  func.func @rmsnorm_head_kernel_recompute(%arg0: i32, %arg1: i32, %arg2: memref<16x128xf32, #tpu.memory_space<vmem>>, %arg3: memref<1x128xf32, #tpu.memory_space<vmem>>, %arg4: memref<128x256xf32, #tpu.memory_space<vmem>>, %arg5: memref<16x256xf32, #tpu.memory_space<vmem>>) attributes {dimension_semantics = [#tpu.dimension_semantics<parallel>, #tpu.dimension_semantics<parallel>], iteration_bounds = array<i64: 1, 1>, scalar_prefetch = 0 : i64, scratch_operands = 0 : i64, tpu.core_type = #tpu.core_type<tc>, window_params = [{transform_indices = @transform_0, window_bounds = array<i64: 16, 128>}, {pipeline_mode = #tpu.pipeline_mode<synchronous>, transform_indices = @transform_1, window_bounds = array<i64: 1, 128>}, {transform_indices = @transform_2, window_bounds = array<i64: 128, 256>}, {transform_indices = @transform_3, window_bounds = array<i64: 16, 256>}]} {
    %c0 = arith.constant 0 : index
    %c0_0 = arith.constant 0 : index
    %0 = vector.load %arg2[%c0, %c0_0] : memref<16x128xf32, #tpu.memory_space<vmem>>, vector<16x128xf32>
    %1 = arith.mulf %0, %0 : vector<16x128xf32>
    %cst = arith.constant dense<0.000000e+00> : vector<16xf32>
    %2 = vector.multi_reduction <add>, %1, %cst [1] : vector<16x128xf32> to vector<16xf32>
    %3 = vector.shape_cast %2 : vector<16xf32> to vector<16x1xf32>
    %cst_1 = arith.constant 1.280000e+02 : f32
    %4 = vector.broadcast %cst_1 : f32 to vector<16x1xf32>
    %5 = arith.divf %3, %4 : vector<16x1xf32>
    %cst_2 = arith.constant 9.99999974E-6 : f32
    %6 = vector.broadcast %cst_2 : f32 to vector<16x1xf32>
    %7 = arith.addf %5, %6 : vector<16x1xf32>
    %8 = math.rsqrt %7 : vector<16x1xf32>
    %9 = vector.broadcast %8 : vector<16x1xf32> to vector<16x128xf32>
    %10 = arith.mulf %0, %9 : vector<16x128xf32>
    %c0_3 = arith.constant 0 : index
    %c0_4 = arith.constant 0 : index
    %11 = vector.load %arg3[%c0_3, %c0_4] : memref<1x128xf32, #tpu.memory_space<vmem>>, vector<1x128xf32>
    %12 = vector.broadcast %11 : vector<1x128xf32> to vector<16x128xf32>
    %13 = arith.mulf %10, %12 : vector<16x128xf32>
    %c0_5 = arith.constant 0 : index
    %c0_6 = arith.constant 0 : index
    %14 = vector.load %arg4[%c0_5, %c0_6] : memref<128x256xf32, #tpu.memory_space<vmem>>, vector<128x256xf32>
    %cst_7 = arith.constant dense<0.000000e+00> : vector<16x256xf32>
    %15 = tpu.matmul %13, %14, %cst_7 {dimension_numbers = #tpu.dot_dimension_numbers<[1], [0], [0], [1], [0, 0, 1, 1], [], []>} : vector<16x128xf32>, vector<128x256xf32>, vector<16x256xf32> -> vector<16x256xf32>
    %c0_8 = arith.constant 0 : index
    %c0_9 = arith.constant 0 : index
    %16 = vector.load %arg5[%c0_8, %c0_9] : memref<16x256xf32, #tpu.memory_space<vmem>>, vector<16x256xf32>
    tpu.vector_store %arg5[%c0_8, %c0_9], %15 {strides = array<i32>} : memref<16x256xf32, #tpu.memory_space<vmem>>, vector<16x256xf32>,
    return
  }
  func.func @transform_0(%arg0: i32, %arg1: i32) -> (i32, i32) {
    %c0_i32 = arith.constant 0 : i32
    %c0_i32_0 = arith.constant 0 : i32
    return %arg0, %c0_i32 : i32, i32
  }
  func.func @transform_1(%arg0: i32, %arg1: i32) -> (i32, i32) {
    %c0_i32 = arith.constant 0 : i32
    %c0_i32_0 = arith.constant 0 : i32
    %c0_i32_1 = arith.constant 0 : i32
    return %c0_i32, %c0_i32_0 : i32, i32
  }
  func.func @transform_2(%arg0: i32, %arg1: i32) -> (i32, i32) {
    %c0_i32 = arith.constant 0 : i32
    %c0_i32_0 = arith.constant 0 : i32
    return %c0_i32, %arg1 : i32, i32
  }
  func.func @transform_3(%arg0: i32, %arg1: i32) -> (i32, i32) {
    %c0_i32 = arith.constant 0 : i32
    return %arg0, %arg1 : i32, i32
  }
}

</mosaic_0001>

<llo_original>
// kernel: tpu_custom_call.1
$region0: #{tpu_custom_call.1}
  #allocation0 [shape = 'u32[]', space=smem, size = 0x4, offset = 0x4, fixed_abs, tag = 'smem constant byte address 0x4 - core index']
  #allocation1 [shape = 'u32[144,128]{1,0:T(1,128)}', space=vmem, size = 0x12000, scoped, tag = 'internal scratch']
  %s0 = inlined_call_operand.hbm [shape: f32[16,128], index: 0, kind: input, shape index: {}]
  %s1 = inlined_call_operand.vmem [shape: f32[1,128], index: 1, kind: input, shape index: {}]
  %s2 = inlined_call_operand.hbm [shape: f32[128,256], index: 2, kind: input, shape index: {}]
  %s3 = inlined_call_operand.hbm [shape: f32[16,256], index: 3, kind: output, shape index: {}]
  %s4 = sld [smem:[#allocation0]]
  $region30: #{tpu_custom_call.1} parent=0
    _
  %s6 = ssub.s32 1, %s4
  %s7 = scalar_select 0, %s6, %s4
  $region1: #{tpu_custom_call.1} parent=0
    #allocation2 [shape = 'u8[8192]{0}', space=vmem, size = 0x2000, scoped, tag = 'input window, operand 0, single buffered']
    #allocation3 [shape = 's32[1]{0}', space=sflag, size = 0x4, scoped, tag = 'scoped memory for tpu_custom_call.1']
    #allocation4 [shape = 's32[1]{0}', space=sflag, size = 0x4, scoped, tag = 'scoped memory for tpu_custom_call.1']
    #allocation5 [shape = 'u8[131072]{0}', space=vmem, size = 0x20000, scoped, tag = 'input window, operand 2, single buffered']
    #allocation6 [shape = 's32[1]{0}', space=sflag, size = 0x4, scoped, tag = 'scoped memory for tpu_custom_call.1']
    #allocation7 [shape = 'u8[16384]{0}', space=vmem, size = 0x4000, scoped, tag = 'output window, operand 0, single buffered']
    %8 = vsyncpa [#allocation3], 0
    %9 = vsyncpa [#allocation6], 0
    %10 = vsyncpa [#allocation4], 0
    // Predicated region
    $region2: #{tpu_custom_call.1} parent=1 // pred_check
      _
    $region3: #{tpu_custom_call.1} parent=1 // pred_check_branch
      %12 = sbr.rel (0) target = $region5
    $region4: #{tpu_custom_call.1} parent=1 // pred_region
      %s14 = ssub.s32 256, 256
      %15 = vsyncadd [#allocation3], %s14
      %s16 = sshll.u32 [#allocation2], 4
      %s17 = int_to_ptr.vmem [resolvable:$true] %s16
      %22 = dma.hbm_to_vmem [thread:$0]  %s0, 256, %s17, [#allocation3], 128, 128, 8
    $region5: #{tpu_custom_call.1} parent=1 // pred_fallthru
      _
    // Predicated region
    $region6: #{tpu_custom_call.1} parent=1 // pred_check
      _
    $region7: #{tpu_custom_call.1} parent=1 // pred_check_branch
      %24 = sbr.rel (0) target = $region9
    $region8: #{tpu_custom_call.1} parent=1 // pred_region
      _
    $region9: #{tpu_custom_call.1} parent=1 // pred_fallthru
      _
    // Predicated region
    $region10: #{tpu_custom_call.1} parent=1 // pred_check
      _
    $region11: #{tpu_custom_call.1} parent=1 // pred_check_branch
      %26 = sbr.rel (0) target = $region13
    $region12: #{tpu_custom_call.1} parent=1 // pred_region
      %s28 = ssub.s32 4096, 4096
      %29 = vsyncadd [#allocation6], %s28
      %s30 = sshll.u32 [#allocation5], 4
      %s31 = int_to_ptr.vmem [resolvable:$true] %s30
      %36 = dma.hbm_to_vmem [thread:$0]  %s2, 4096, %s31, [#allocation6], 256, 256, 16
    $region13: #{tpu_custom_call.1} parent=1 // pred_fallthru
      _
    // Predicated region
    $region14: #{tpu_custom_call.1} parent=1 // pred_check
      _
    $region15: #{tpu_custom_call.1} parent=1 // pred_check_branch
      %38 = sbr.rel (0) target = $region17
    $region16: #{tpu_custom_call.1} parent=1 // pred_region
      %39 = dma.done [#allocation3], 256
    $region17: #{tpu_custom_call.1} parent=1 // pred_fallthru
      _
    // Predicated region
    $region18: #{tpu_custom_call.1} parent=1 // pred_check
      _
    $region19: #{tpu_custom_call.1} parent=1 // pred_check_branch
      %41 = sbr.rel (0) target = $region21
    $region20: #{tpu_custom_call.1} parent=1 // pred_region
      %42 = dma.done [#allocation6], 4096
    $region21: #{tpu_custom_call.1} parent=1 // pred_fallthru
      _
    %v43 = vld [vmem:[#allocation2] sm:$0xff]
    %v44 = vld [vmem:[#allocation2 + $0x8] sm:$0xff]
    %v45 = vmul.f32 %v43, %v43
    %v46 = vmul.f32 %v44, %v44
    %47 = vadd.xlane.f32.xlu0 %v45
    %v48 = vpop.xlane.xlu0 %47
    %49 = vadd.xlane.f32.xlu0 %v46
    %v50 = vpop.xlane.xlu0 %49
    %v51 = vrcp.pop 128.0
    %v52 = vmul.f32 %v48, %v51
    %v53 = vmul.f32 %v50, %v51
    %v54 = vadd.f32 %v52, 1e-05
    %v55 = vadd.f32 %v53, 1e-05
    %v56 = vrsqrt.pop %v54
    %v57 = vrsqrt.pop %v55
    %v58 = vmul.f32 %v43, %v56
    %v59 = vmul.f32 %v44, %v57
    %v60 = vld [vmem:[%s1] sm:$0x1]
    %v62 = vlaneseq
    %v63 = vshrl.u32 %v62, 7
    %v64 = vsub.s32 0, %v63
    %v65 = vrot.slane %v60, %v64
    %v67 = vmul.f32 %v58, %v65
    %v68 = vmul.f32 %v59, %v65
    %v69 = vld [vmem:[#allocation5] sm:$0xff]
    %v70 = vld [vmem:[#allocation5 + $0x8] sm:$0xff]
    %v71 = vld [vmem:[#allocation5 + $0x10] sm:$0xff]
    %v72 = vld [vmem:[#allocation5 + $0x18] sm:$0xff]
    %v73 = vld [vmem:[#allocation5 + $0x20] sm:$0xff]
    %v74 = vld [vmem:[#allocation5 + $0x28] sm:$0xff]
    %v75 = vld [vmem:[#allocation5 + $0x30] sm:$0xff]
    %v76 = vld [vmem:[#allocation5 + $0x38] sm:$0xff]
    %v77 = vld [vmem:[#allocation5 + $0x40] sm:$0xff]
    %v78 = vld [vmem:[#allocation5 + $0x48] sm:$0xff]
    %v79 = vld [vmem:[#allocation5 + $0x50] sm:$0xff]
    %v80 = vld [vmem:[#allocation5 + $0x58] sm:$0xff]
    %v81 = vld [vmem:[#allocation5 + $0x60] sm:$0xff]
    %v82 = vld [vmem:[#allocation5 + $0x68] sm:$0xff]
    %v83 = vld [vmem:[#allocation5 + $0x70] sm:$0xff]
    %v84 = vld [vmem:[#allocation5 + $0x78] sm:$0xff]
    %v85 = vld [vmem:[#allocation5 + $0x80] sm:$0xff]
    %v86 = vld [vmem:[#allocation5 + $0x88] sm:$0xff]
    %v87 = vld [vmem:[#allocation5 + $0x90] sm:$0xff]
    %v88 = vld [vmem:[#allocation5 + $0x98] sm:$0xff]
    %v89 = vld [vmem:[#allocation5 + $0xa0] sm:$0xff]
    %v90 = vld [vmem:[#allocation5 + $0xa8] sm:$0xff]
    %v91 = vld [vmem:[#allocation5 + $0xb0] sm:$0xff]
    %v92 = vld [vmem:[#allocation5 + $0xb8] sm:$0xff]
    %v93 = vld [vmem:[#allocation5 + $0xc0] sm:$0xff]
    %v94 = vld [vmem:[#allocation5 + $0xc8] sm:$0xff]
    %v95 = vld [vmem:[#allocation5 + $0xd0] sm:$0xff]
    %v96 = vld [vmem:[#allocation5 + $0xd8] sm:$0xff]
    %v97 = vld [vmem:[#allocation5 + $0xe0] sm:$0xff]
    %v98 = vld [vmem:[#allocation5 + $0xe8] sm:$0xff]
    %v99 = vld [vmem:[#allocation5 + $0xf0] sm:$0xff]
    %v100 = vld [vmem:[#allocation5 + $0xf8] sm:$0xff]
    %101 = vmatprep.subr.mxu0 %v70
    %102 = vmatpush1.msra.mxu0 %v69
    %103 = vmatprep.subr.mxu0 %v72
    %104 = vmatpush1.msra.mxu0 %v71
    %105 = vmatprep.subr.mxu0 %v74
    %106 = vmatpush1.msra.mxu0 %v73
    %107 = vmatprep.subr.mxu0 %v76
    %108 = vmatpush1.msra.mxu0 %v75
    %109 = vmatprep.subr.mxu0 %v78
    %110 = vmatpush1.msra.mxu0 %v77
    %111 = vmatprep.subr.mxu0 %v80
    %112 = vmatpush1.msra.mxu0 %v79
    %113 = vmatprep.subr.mxu0 %v82
    %114 = vmatpush1.msra.mxu0 %v81
    %115 = vmatprep.subr.mxu0 %v84
    %116 = vmatpush1.msra.mxu0 %v83
    %117 = vmatprep.subr.mxu0 %v86
    %118 = vmatpush1.msra.mxu0 %v85
    %119 = vmatprep.subr.mxu0 %v88
    %120 = vmatpush1.msra.mxu0 %v87
    %121 = vmatprep.subr.mxu0 %v90
    %122 = vmatpush1.msra.mxu0 %v89
    %123 = vmatprep.subr.mxu0 %v92
    %124 = vmatpush1.msra.mxu0 %v91
    %125 = vmatprep.subr.mxu0 %v94
    %126 = vmatpush1.msra.mxu0 %v93
    %127 = vmatprep.subr.mxu0 %v96
    %128 = vmatpush1.msra.mxu0 %v95
    %129 = vmatprep.subr.mxu0 %v98
    %130 = vmatpush1.msra.mxu0 %v97
    %131 = vmatprep.subr.mxu0 %v100
    %132 = vmatpush1.msra.mxu0 %v99
    %133 = vmatprep.subr.mxu0 0.0
    %134 = vmatpush1.msra.mxu0 0.0
    %135 = vmatprep.subr.mxu0 0.0
    %136 = vmatpush1.msra.mxu0 0.0
    %137 = vmatprep.subr.mxu0 0.0
    %138 = vmatpush1.msra.mxu0 0.0
    %139 = vmatprep.subr.mxu0 0.0
    %140 = vmatpush1.msra.mxu0 0.0
    %141 = vmatprep.subr.mxu0 0.0
    %142 = vmatpush1.msra.mxu0 0.0
    %143 = vmatprep.subr.mxu0 0.0
    %144 = vmatpush1.msra.mxu0 0.0
    %145 = vmatprep.subr.mxu0 0.0
    %146 = vmatpush1.msra.mxu0 0.0
    %147 = vmatprep.subr.mxu0 0.0
    %148 = vmatpush1.msra.mxu0 0.0
    %149 = vmatprep.subr.mxu0 0.0
    %150 = vmatpush1.msra.mxu0 0.0
    %151 = vmatprep.subr.mxu0 0.0
    %152 = vmatpush1.msra.mxu0 0.0
    %153 = vmatprep.subr.mxu0 0.0
    %154 = vmatpush1.msra.mxu0 0.0
    %155 = vmatprep.subr.mxu0 0.0
    %156 = vmatpush1.msra.mxu0 0.0
    %157 = vmatprep.subr.mxu0 0.0
    %158 = vmatpush1.msra.mxu0 0.0
    %159 = vmatprep.subr.mxu0 0.0
    %160 = vmatpush1.msra.mxu0 0.0
    %161 = vmatprep.subr.mxu0 0.0
    %162 = vmatpush1.msra.mxu0 0.0
    %163 = vmatprep.subr.mxu0 0.0
    %164 = vmatpush1.msra.mxu0 0.0
    %165 = vmatprep.mubr.f32.mxu0 0.0
    %166 = vmatmul.mubr.f32.gmra.mrb[0].mxu0 %v67
    %v167 = vpop.f32.mrb[0].mxu0
    %v168 = vadd.f32 0.0, %v167
    %v169 = vpop.f32.mrb[0].mxu0
    %v170 = vadd.f32 0.0, %v169
    %171 = vmatprep.mubr.f32.mxu0 0.0
    %172 = vmatmul.mubr.f32.gmra.mrb[0].mxu0 %v68
    %v173 = vpop.f32.mrb[0].mxu0
    %v174 = vadd.f32 0.0, %v173
    %v175 = vpop.f32.mrb[0].mxu0
    %v176 = vadd.f32 0.0, %v175
    %177 = vdwg.mxu0
    %178 = vst [vmem:[#allocation7] sm:$0xff] %v168
    %179 = vst [vmem:[#allocation7 + $0x8] sm:$0xff] %v170
    %180 = vst [vmem:[#allocation7 + $0x10] sm:$0xff] %v174
    %181 = vst [vmem:[#allocation7 + $0x18] sm:$0xff] %v176
    // Predicated region
    $region22: #{tpu_custom_call.1} parent=1 // pred_check
      _
    $region23: #{tpu_custom_call.1} parent=1 // pred_check_branch
      %183 = sbr.rel (0) target = $region25
    $region24: #{tpu_custom_call.1} parent=1 // pred_region
      %s185 = ssub.s32 512, 512
      %186 = vsyncadd [#allocation4], %s185
      %s187 = sshll.u32 [#allocation7], 4
      %s188 = int_to_ptr.vmem [resolvable:$true] %s187
      %193 = dma.vmem_to_hbm [thread:$0]  %s188, 512, %s3, [#allocation4], 256, 256, 16
    $region25: #{tpu_custom_call.1} parent=1 // pred_fallthru
      _
    // Predicated region
    $region26: #{tpu_custom_call.1} parent=1 // pred_check
      _
    $region27: #{tpu_custom_call.1} parent=1 // pred_check_branch
      %195 = sbr.rel (0) target = $region29
    $region28: #{tpu_custom_call.1} parent=1 // pred_region
      %196 = dma.done [#allocation4], 512
    $region29: #{tpu_custom_call.1} parent=1 // pred_fallthru
      _
    %197 = vsyncpa [#allocation3], 1
    %198 = vsyncpa [#allocation6], 1
    %199 = vsyncpa [#allocation4], 1

</llo_original>
